<compile_context>
chip_gen: v6e
topology: v6e:2x2x1
jax: 0.10.0
libtpu: 0.0.40
codegen_flags: <defaults>
</compile_context>

<pallas_src>
import functools

import jax
import jax.numpy as jnp
from jax.experimental import pallas as pl
from jax.experimental.pallas import tpu as pltpu

EPS = 1e-5


def _round_up(v, m):
    return (v + m - 1) // m * m


def _balanced_tile(total, max_tile, align):
    """Largest aligned tile <= max_tile, rebalanced to minimize padding."""
    max_tile = max(align, max_tile - max_tile % align)
    tile = min(max_tile, _round_up(total, align))
    n_tiles = -(-total // tile)
    return _round_up(-(-total // n_tiles), align)


# ---------------------------------------------------------------------------
# Kernels
# ---------------------------------------------------------------------------

def _fc_block_kernel_1step(x_ref, w_ref, p_ref, o_ref):
    """Whole K reduction in a single MXU call, fused epilogue (no scratch)."""
    acc = jnp.dot(x_ref[...], w_ref[...], preferred_element_type=jnp.float32)
    acc = acc + p_ref[0:1, :]                       # bias
    y = jnp.maximum(acc, 0.0)                       # ReLU
    y = y * p_ref[1:2, :] + p_ref[2:3, :]           # folded BatchNorm1d (eval)
    o_ref[...] = y.astype(o_ref.dtype)


def _fc_block_kernel_multi(x_ref, w_ref, p_ref, o_ref, acc_ref):
    """K-tiled reduction with f32 VMEM accumulator."""
    k = pl.program_id(2)

    @pl.when(k == 0)
    def _():
        # Start accumulation from the broadcast bias row (shorter epilogue).
        acc_ref[...] = jnp.broadcast_to(p_ref[0:1, :], acc_ref.shape)

    acc_ref[...] += jnp.dot(x_ref[...], w_ref[...],
                            preferred_element_type=jnp.float32)

    @pl.when(k == pl.num_programs(2) - 1)
    def _():
        y = jnp.maximum(acc_ref[...], 0.0)          # ReLU
        y = y * p_ref[1:2, :] + p_ref[2:3, :]       # folded BatchNorm1d (eval)
        o_ref[...] = y.astype(o_ref.dtype)


# ---------------------------------------------------------------------------
# Wrappers
# ---------------------------------------------------------------------------

def fc_block_prepare(w_t, b, gamma, beta, running_mean, running_var, *,
                     block_n=512, block_k=1024, compute_dtype=jnp.bfloat16):
    """One-time parameter preparation (hoisted out of the per-call hot path).

    w_t: (in_feats, out_feats) = PyTorch weight transposed.
    b, gamma, beta, running_mean, running_var: (1, out_feats) or (out_feats,).

    Returns (w_padded, params, cfg): `params` is the packed
    [bias; bn_scale; bn_shift] (3, Np) f32 array, `cfg` are the static
    keyword args for fc_block_apply.
    """
    in_feats, out_feats = w_t.shape

    bn = _balanced_tile(out_feats, block_n, 128)
    bk = _balanced_tile(in_feats, block_k, 128)
    Np = _round_up(out_feats, bn)
    Kp = _round_up(in_feats, bk)

    # Megacore: guarantee >= 2 blocks along the parallel N axis whenever the
    # feature dimension allows it, so small-batch calls still fill 2 TCs.
    if Np // bn == 1 and out_feats > 128:
        bn = _round_up(-(-out_feats // 2), 128)
        Np = _round_up(out_feats, bn)

    # Fold BatchNorm1d (inference) into per-feature scale/shift.
    scale = gamma.reshape(1, -1) * jax.lax.rsqrt(
        running_var.reshape(1, -1) + EPS)
    shift = beta.reshape(1, -1) - running_mean.reshape(1, -1) * scale
    params = jnp.concatenate(
        [b.reshape(1, -1), scale, shift], axis=0).astype(jnp.float32)
    params = jnp.pad(params, ((0, 0), (0, Np - out_feats)))

    w_padded = jnp.pad(w_t.astype(compute_dtype),
                       ((0, Kp - in_feats), (0, Np - out_feats)))

    cfg = dict(out_feats=out_feats, bn=bn, bk=bk)
    return w_padded, params, cfg


@functools.partial(jax.jit,
                   static_argnames=("out_feats", "bn", "bk", "block_m",
                                    "out_dtype"))
def fc_block_apply(x, w_padded, params, *, out_feats, bn, bk,
                   block_m=512, out_dtype=None):
    """Fused Linear -> ReLU -> BatchNorm1d(eval) using prepared parameters."""
    B, in_feats = x.shape
    Kp, Np = w_padded.shape
    compute_dtype = w_padded.dtype
    if out_dtype is None:
        out_dtype = x.dtype

    bm = _balanced_tile(B, block_m, 8)
    Bp = _round_up(B, bm)
    grid_m, grid_n, grid_k = Bp // bm, Np // bn, Kp // bk

    # Megacore: if both parallel axes collapsed to one block, split M.
    if grid_m == 1 and grid_n == 1 and B > 8:
        bm = _round_up(-(-B // 2), 8)
        Bp = _round_up(B, bm)
        grid_m = Bp // bm

    xc = x.astype(compute_dtype)
    if Bp != B or Kp != in_feats:
        xc = jnp.pad(xc, ((0, Bp - B), (0, Kp - in_feats)))

    # VMEM budget: double-buffered inputs/outputs + accumulator + headroom,
    # capped at 48 MiB so the same config is safe on v7x's 64 MiB VMEM.
    ib = jnp.dtype(compute_dtype).itemsize
    ob = jnp.dtype(out_dtype).itemsize
    vmem_est = (2 * (bm * bk * ib + bk * bn * ib + 3 * bn * 4 + bm * bn * ob)
                + bm * bn * 4)
    vmem_limit = int(min(max(2 * vmem_est, 32 * 1024 * 1024),
                         48 * 1024 * 1024))

    if grid_k == 1:
        out = pl.pallas_call(
            _fc_block_kernel_1step,
            out_shape=jax.ShapeDtypeStruct((Bp, Np), out_dtype),
            grid_spec=pltpu.PrefetchScalarGridSpec(
                num_scalar_prefetch=0,
                grid=(grid_m, grid_n),
                in_specs=[
                    pl.BlockSpec((bm, Kp), lambda i, j: (i, 0)),   # x tile
                    pl.BlockSpec((Kp, bn), lambda i, j: (0, j)),   # W tile
                    pl.BlockSpec((3, bn), lambda i, j: (0, j)),    # bias/scale/shift
                ],
                out_specs=pl.BlockSpec((bm, bn), lambda i, j: (i, j)),
            ),
            compiler_params=pltpu.CompilerParams(
                dimension_semantics=("parallel", "parallel"),
                vmem_limit_bytes=vmem_limit),
        )(xc, w_padded, params)
    else:
        out = pl.pallas_call(
            _fc_block_kernel_multi,
            out_shape=jax.ShapeDtypeStruct((Bp, Np), out_dtype),
            grid_spec=pltpu.PrefetchScalarGridSpec(
                num_scalar_prefetch=0,
                grid=(grid_m, grid_n, grid_k),
                in_specs=[
                    pl.BlockSpec((bm, bk), lambda i, j, k: (i, k)),   # x tile
                    pl.BlockSpec((bk, bn), lambda i, j, k: (k, j)),   # W tile
                    pl.BlockSpec((3, bn), lambda i, j, k: (0, j)),    # packed rows
                ],
                out_specs=pl.BlockSpec((bm, bn), lambda i, j, k: (i, j)),
                scratch_shapes=[pltpu.VMEM((bm, bn), jnp.float32)],
            ),
            compiler_params=pltpu.CompilerParams(
                dimension_semantics=("parallel", "parallel", "arbitrary"),
                vmem_limit_bytes=vmem_limit),
        )(xc, w_padded, params)

    return out[:B, :out_feats]


def fc_block(x, w_t, b, gamma, beta, running_mean, running_var, *,
             block_m=512, block_n=512, block_k=1024,
             compute_dtype=jnp.bfloat16, out_dtype=None):
    """Convenience one-shot wrapper: prepare + apply.

    For repeated inference call fc_block_prepare() once and reuse
    fc_block_apply() -- this one-shot path re-pads/casts the weight per call.
    """
    w_padded, params, cfg = fc_block_prepare(
        w_t, b, gamma, beta, running_mean, running_var,
        block_n=block_n, block_k=block_k, compute_dtype=compute_dtype)
    return fc_block_apply(x, w_padded, params, block_m=block_m,
                          out_dtype=out_dtype, **cfg)


def reference(x, w_t, b, gamma, beta, mean, var):
    y = x @ w_t + b
    y = jnp.maximum(y, 0.0)
    return (y - mean) / jnp.sqrt(var + EPS) * gamma + beta


if __name__ == "__main__":
    key = jax.random.PRNGKey(0)

    # --- Test 1: default bf16 matmul inputs, prepare-once + fast path -------
    batch, in_feats, out_feats = 16, 32, 64
    kx, kw, kb, kg, kbe, km, kv, key = jax.random.split(key, 8)

    x = jax.random.normal(kx, (batch, in_feats), dtype=jnp.float32)
    w_t = jax.random.normal(kw, (in_feats, out_feats), dtype=jnp.float32) * 0.1
    b = jax.random.normal(kb, (1, out_feats), dtype=jnp.float32) * 0.1
    gamma = 1.0 + 0.1 * jax.random.normal(kg, (1, out_feats), dtype=jnp.float32)
    beta = 0.1 * jax.random.normal(kbe, (1, out_feats), dtype=jnp.float32)
    running_mean = 0.1 * jax.random.normal(km, (1, out_feats), dtype=jnp.float32)
    running_var = jnp.abs(jax.random.normal(kv, (1, out_feats),
                                            dtype=jnp.float32)) + 0.5

    w_padded, params, cfg = fc_block_prepare(
        w_t, b, gamma, beta, running_mean, running_var)     # one-time prep
    out = fc_block_apply(x, w_padded, params, **cfg)
    out = jax.block_until_ready(out)

    ref = reference(x, w_t, b, gamma, beta, running_mean, running_var)
    assert out.shape == (batch, out_feats)
    assert jnp.allclose(out, ref, atol=3e-2, rtol=3e-2), \
        "bf16 fast-path mismatch vs reference"

    # --- Test 2: f32 inputs, forced K/N tiling (multi-step accumulator) -----
    in2, out2 = 384, 256
    kx2, kw2, kb2, kg2, kbe2, km2, kv2, key = jax.random.split(key, 8)
    x2 = jax.random.normal(kx2, (batch, in2), dtype=jnp.float32)
    w2 = jax.random.normal(kw2, (in2, out2), dtype=jnp.float32) * 0.05
    b2 = jax.random.normal(kb2, (1, out2), dtype=jnp.float32) * 0.1
    g2 = 1.0 + 0.1 * jax.random.normal(kg2, (1, out2), dtype=jnp.float32)
    be2 = 0.1 * jax.random.normal(kbe2, (1, out2), dtype=jnp.float32)
    m2 = 0.1 * jax.random.normal(km2, (1, out2), dtype=jnp.float32)
    v2 = jnp.abs(jax.random.normal(kv2, (1, out2), dtype=jnp.float32)) + 0.5

    out2_res = fc_block(x2, w2, b2, g2, be2, m2, v2,
                        block_n=128, block_k=128,            # grid = (1, 2, 3)
                        compute_dtype=jnp.float32)
    out2_res = jax.block_until_ready(out2_res)
    ref2 = reference(x2, w2, b2, g2, be2, m2, v2)
    assert out2_res.shape == (batch, out2)
    assert jnp.allclose(out2_res, ref2, atol=1e-4, rtol=1e-4), \
        "f32 multi-K mismatch vs reference"

    print("KERNEL_OK")
</pallas_src>

<mosaic_0001>
module attributes {stable_mosaic.version = 11 : i64} {
  func.func @_fc_block_kernel_1step(%arg0: i32, %arg1: i32, %arg2: memref<8x128xbf16, #tpu.memory_space<vmem>>, %arg3: memref<128x128xbf16, #tpu.memory_space<vmem>>, %arg4: memref<3x128xf32, #tpu.memory_space<vmem>>, %arg5: memref<8x128xf32, #tpu.memory_space<vmem>>) attributes {dimension_semantics = [#tpu.dimension_semantics<parallel>, #tpu.dimension_semantics<parallel>], iteration_bounds = array<i64: 2, 1>, scalar_prefetch = 0 : i64, scratch_operands = 0 : i64, tpu.core_type = #tpu.core_type<tc>, window_params = [{transform_indices = @transform_0, window_bounds = array<i64: 8, 128>}, {transform_indices = @transform_1, window_bounds = array<i64: 128, 128>}, {transform_indices = @transform_2, window_bounds = array<i64: 3, 128>}, {transform_indices = @transform_3, window_bounds = array<i64: 8, 128>}]} {
    %c0 = arith.constant 0 : index
    %c0_0 = arith.constant 0 : index
    %0 = vector.load %arg2[%c0, %c0_0] : memref<8x128xbf16, #tpu.memory_space<vmem>>, vector<8x128xbf16>
    %c0_1 = arith.constant 0 : index
    %c0_2 = arith.constant 0 : index
    %1 = vector.load %arg3[%c0_1, %c0_2] : memref<128x128xbf16, #tpu.memory_space<vmem>>, vector<128x128xbf16>
    %cst = arith.constant dense<0.000000e+00> : vector<8x128xf32>
    %2 = tpu.matmul %0, %1, %cst {dimension_numbers = #tpu.dot_dimension_numbers<[1], [0], [0], [1], [0, 0, 1, 1], [], []>} : vector<8x128xbf16>, vector<128x128xbf16>, vector<8x128xf32> -> vector<8x128xf32>
    %c0_3 = arith.constant 0 : index
    %c0_4 = arith.constant 0 : index
    %3 = vector.load %arg4[%c0_3, %c0_4] : memref<3x128xf32, #tpu.memory_space<vmem>>, vector<1x128xf32>
    %4 = vector.broadcast %3 : vector<1x128xf32> to vector<8x128xf32>
    %5 = arith.addf %2, %4 : vector<8x128xf32>
    %cst_5 = arith.constant 0.000000e+00 : f32
    %6 = vector.broadcast %cst_5 : f32 to vector<8x128xf32>
    %7 = arith.maximumf %5, %6 : vector<8x128xf32>
    %c1 = arith.constant 1 : index
    %c0_6 = arith.constant 0 : index
    %8 = vector.load %arg4[%c1, %c0_6] : memref<3x128xf32, #tpu.memory_space<vmem>>, vector<1x128xf32>
    %9 = vector.broadcast %8 : vector<1x128xf32> to vector<8x128xf32>
    %10 = arith.mulf %7, %9 : vector<8x128xf32>
    %c2 = arith.constant 2 : index
    %c0_7 = arith.constant 0 : index
    %11 = vector.load %arg4[%c2, %c0_7] : memref<3x128xf32, #tpu.memory_space<vmem>>, vector<1x128xf32>
    %12 = vector.broadcast %11 : vector<1x128xf32> to vector<8x128xf32>
    %13 = arith.addf %10, %12 : vector<8x128xf32>
    %c0_8 = arith.constant 0 : index
    %c0_9 = arith.constant 0 : index
    %14 = vector.load %arg5[%c0_8, %c0_9] : memref<8x128xf32, #tpu.memory_space<vmem>>, vector<8x128xf32>
    tpu.vector_store %arg5[%c0_8, %c0_9], %13 {strides = array<i32>} : memref<8x128xf32, #tpu.memory_space<vmem>>, vector<8x128xf32>,
    return
  }
  func.func @transform_0(%arg0: i32, %arg1: i32) -> (i32, i32) {
    %c0_i32 = arith.constant 0 : i32
    %c0_i32_0 = arith.constant 0 : i32
    return %arg0, %c0_i32 : i32, i32
  }
  func.func @transform_1(%arg0: i32, %arg1: i32) -> (i32, i32) {
    %c0_i32 = arith.constant 0 : i32
    %c0_i32_0 = arith.constant 0 : i32
    return %c0_i32, %arg1 : i32, i32
  }
  func.func @transform_2(%arg0: i32, %arg1: i32) -> (i32, i32) {
    %c0_i32 = arith.constant 0 : i32
    %c0_i32_0 = arith.constant 0 : i32
    return %c0_i32, %arg1 : i32, i32
  }
  func.func @transform_3(%arg0: i32, %arg1: i32) -> (i32, i32) {
    %c0_i32 = arith.constant 0 : i32
    return %arg0, %arg1 : i32, i32
  }
}

</mosaic_0001>

<llo_original>
// kernel: fc_block_apply.1
$region0: #{fc_block_apply.1}
  #allocation0 [shape = 'u32[]', space=smem, size = 0x4, offset = 0x4, fixed_abs, tag = 'smem constant byte address 0x4 - core index']
  #allocation1 [shape = 'u32[144,128]{1,0:T(1,128)}', space=vmem, size = 0x12000, scoped, tag = 'internal scratch']
  %s0 = inlined_call_operand.vmem [shape: bf16[16,128], index: 0, kind: input, shape index: {}]
  %s1 = inlined_call_operand.hbm [shape: bf16[128,128], index: 1, kind: input, shape index: {}]
  %s2 = inlined_call_operand.vmem [shape: f32[3,128], index: 2, kind: input, shape index: {}]
  %s3 = inlined_call_operand.hbm [shape: f32[16,128], index: 3, kind: output, shape index: {}]
  %s4 = sld [smem:[#allocation0]]
  $region49: #{fc_block_apply.1} parent=0
    _
  %s6 = ssub.s32 1, %s4
  %s7 = scalar_select 0, %s6, %s4
  $region1: #{fc_block_apply.1} parent=0
    #allocation2 [shape = 'u8[32768]{0}', space=vmem, size = 0x8000, scoped, tag = 'input window, operand 1, single buffered']
    #allocation3 [shape = 's32[2]{0}', space=sflag, size = 0x8, scoped, tag = 'scoped memory for fc_block_apply.1']
    #allocation4 [shape = 's32[2]{0}', space=sflag, size = 0x8, scoped, tag = 'scoped memory for fc_block_apply.1']
    #allocation5 [shape = 'u8[8192]{0}', space=vmem, size = 0x2000, scoped, tag = 'output window, operand 0']
    %8 = vsyncpa [#allocation3], 0
    %9 = vsyncpa [#allocation4], 0
    %s10 = scalar_lea.sflag [#allocation4], 1
    %11 = vsyncpa %s10, 0
    loop: start=0, step=1, limit=4
    $region2: #{fc_block_apply.1} parent=1 // loop_pre_header
      _
    $region3: #{fc_block_apply.1} parent=1 // loop_header
      %s13 = sphi 0, %s17
      %p14 = scmp.ge.s32.totalorder %s13, 4
      %s20 = sphi 0, %s32
      %s21 = sphi 0, %s28
      %s22 = sphi 0, %s20
      %s23 = sphi 0, %s21
      %s24 = sphi 0, %s22
      %s25 = sphi 0, %s23
      %s35 = sphi 0, %s37
      %s38 = sphi 0, %s35
      %s39 = sphi 0, %s38
      %s55 = sphi 0, %s39
      %s61 = sphi 0, %s63
      %s64 = sphi 0, %s61
      %s65 = sphi 0, %s64
      %s81 = sphi 0, %s65
      %s87 = sphi 0, %s89
      %s90 = sphi 0, %s87
      %s91 = sphi 0, %s90
      %s107 = sphi 0, %s91
      %s115 = sphi 0, %s117
      %s118 = sphi 0, %s115
      %s119 = sphi 0, %s118
      %s135 = sphi 0, %s119
    $region4: #{fc_block_apply.1} parent=1 // loop_header_branch
      %16 = sbr.rel (%p14) target = $region8
    $region5: #{fc_block_apply.1} parent=1 // loop_body
      %s18 = ssub.s32 %s13, 1
      %s19 = ssub.s32 %s13, 2
      %s26 = sadd.s32 1, %s21
      %p27 = scmp.ge.s32.totalorder %s26, 1
      %s28 = scalar_select %p27, 0, %s26
      %s29 = sadd.s32 1, %s20
      %s30 = scalar_select %p27, %s29, %s20
      %p31 = scmp.ge.s32.totalorder %s30, 2
      %s32 = scalar_select %p31, 0, %s30
      %s33 = ssub.s32 %s20, %s32
      %p34 = scmp.eq.s32.totalorder %s33, 0
      %s36 = sadd.s32 %s35, 1
      %s37 = scalar_select %p34, %s35, %s36
      %p40 = pneg %p34
      %p41 = scmp.eq.s32.totalorder %s13, 1
      %p42 = por %p40, %p41
      %p43 = scmp.ne.s32.totalorder %s35, %s38
      %p44 = scmp.eq.s32.totalorder %s13, 0
      %p45 = por %p43, %p44
      %p46 = scmp.ne.s32.totalorder %s35, %s38
      %p47 = scmp.eq.s32.totalorder %s18, 1
      %p48 = por %p46, %p47
      %p49 = scmp.ne.s32.totalorder %s38, %s39
      %p50 = scmp.eq.s32.totalorder %s18, 0
      %p51 = por %p49, %p50
      %p52 = scmp.ne.s32.totalorder %s38, %s39
      %p53 = scmp.eq.s32.totalorder %s19, 1
      %p54 = por %p52, %p53
      %p56 = scmp.ne.s32.totalorder %s39, %s55
      %p57 = scmp.eq.s32.totalorder %s19, 0
      %p58 = por %p56, %p57
      %s59 = ssub.s32 %s21, %s28
      %p60 = scmp.eq.s32.totalorder %s59, 0
      %s62 = sadd.s32 %s61, 1
      %s63 = scalar_select %p60, %s61, %s62
      %p66 = pneg %p60
      %p67 = scmp.eq.s32.totalorder %s13, 1
      %p68 = por %p66, %p67
      %p69 = scmp.ne.s32.totalorder %s61, %s64
      %p70 = scmp.eq.s32.totalorder %s13, 0
      %p71 = por %p69, %p70
      %p72 = scmp.ne.s32.totalorder %s61, %s64
      %p73 = scmp.eq.s32.totalorder %s18, 1
      %p74 = por %p72, %p73
      %p75 = scmp.ne.s32.totalorder %s64, %s65
      %p76 = scmp.eq.s32.totalorder %s18, 0
      %p77 = por %p75, %p76
      %p78 = scmp.ne.s32.totalorder %s64, %s65
      %p79 = scmp.eq.s32.totalorder %s19, 1
      %p80 = por %p78, %p79
      %p82 = scmp.ne.s32.totalorder %s65, %s81
      %p83 = scmp.eq.s32.totalorder %s19, 0
      %p84 = por %p82, %p83
      %s85 = ssub.s32 %s21, %s28
      %p86 = scmp.eq.s32.totalorder %s85, 0
      %s88 = sadd.s32 %s87, 1
      %s89 = scalar_select %p86, %s87, %s88
      %p92 = pneg %p86
      %p93 = scmp.eq.s32.totalorder %s13, 1
      %p94 = por %p92, %p93
      %p95 = scmp.ne.s32.totalorder %s87, %s90
      %p96 = scmp.eq.s32.totalorder %s13, 0
      %p97 = por %p95, %p96
      %p98 = scmp.ne.s32.totalorder %s87, %s90
      %p99 = scmp.eq.s32.totalorder %s18, 1
      %p100 = por %p98, %p99
      %p101 = scmp.ne.s32.totalorder %s90, %s91
      %p102 = scmp.eq.s32.totalorder %s18, 0
      %p103 = por %p101, %p102
      %p104 = scmp.ne.s32.totalorder %s90, %s91
      %p105 = scmp.eq.s32.totalorder %s19, 1
      %p106 = por %p104, %p105
      %p108 = scmp.ne.s32.totalorder %s91, %s107
      %p109 = scmp.eq.s32.totalorder %s19, 0
      %p110 = por %p108, %p109
      %s111 = ssub.s32 %s20, %s32
      %s112 = ssub.s32 %s21, %s28
      %s113 = sor.u32 %s111, %s112
      %p114 = scmp.eq.s32.totalorder %s113, 0
      %s116 = sadd.s32 %s115, 1
      %s117 = scalar_select %p114, %s115, %s116
      %p120 = pneg %p114
      %p121 = scmp.eq.s32.totalorder %s13, 1
      %p122 = por %p120, %p121
      %p123 = scmp.ne.s32.totalorder %s115, %s118
      %p124 = scmp.eq.s32.totalorder %s13, 0
      %p125 = por %p123, %p124
      %p126 = scmp.ne.s32.totalorder %s115, %s118
      %p127 = scmp.eq.s32.totalorder %s18, 1
      %p128 = por %p126, %p127
      %p129 = scmp.ne.s32.totalorder %s118, %s119
      %p130 = scmp.eq.s32.totalorder %s18, 0
      %p131 = por %p129, %p130
      %p132 = scmp.ne.s32.totalorder %s118, %s119
      %p133 = scmp.eq.s32.totalorder %s19, 1
      %p134 = por %p132, %p133
      %p136 = scmp.ne.s32.totalorder %s119, %s135
      %p137 = scmp.eq.s32.totalorder %s19, 0
      %p138 = por %p136, %p137
      %p139 = scmp.le.s32.totalorder 1, %s13
      %p140 = scmp.lt.s32.totalorder %s13, 3
      %p141 = pnand %p139, %p140
      %p142 = pneg %p141
      // Predicated region
      $region9: #{fc_block_apply.1} parent=5 // pred_check
        _
      $region10: #{fc_block_apply.1} parent=5 // pred_check_branch
        %144 = sbr.rel (%p141) target = $region12
      $region11: #{fc_block_apply.1} parent=5 // pred_region
        %s145 = ssub.s32 %s13, 1
        // Predicated region
        $region13: #{fc_block_apply.1} parent=11 // pred_check
          %p146 = pneg %p77
        $region14: #{fc_block_apply.1} parent=11 // pred_check_branch
          %148 = sbr.rel (%p146) target = $region16
        $region15: #{fc_block_apply.1} parent=11 // pred_region
          %s150 = ssub.s32 1024, 1024
          %151 = vsyncadd [#allocation3], %s150
          %s152 = smul.addr %s23, 64
          %s153 = scalar_lea.hbm %s1, %s152
          %s154 = sshll.u32 [#allocation2], 4
          %s155 = int_to_ptr.vmem [resolvable:$true] %s154
          %160 = dma.hbm_to_vmem [thread:$0]  %s153, 1024, %s155, [#allocation3], 64, 64, 4
        $region16: #{fc_block_apply.1} parent=11 // pred_fallthru
          _
        // Predicated region
        $region17: #{fc_block_apply.1} parent=11 // pred_check
          %p161 = pneg %p103
        $region18: #{fc_block_apply.1} parent=11 // pred_check_branch
          %163 = sbr.rel (%p161) target = $region20
        $region19: #{fc_block_apply.1} parent=11 // pred_region
          %p164 = scmp.lt.s32.totalorder %s23, 0
          %s165 = scalar_select %p164, %s23, 0
          %s166 = smul.addr %s165, 4
          %s167 = scalar_lea.vmem %s2, %s166
        $region20: #{fc_block_apply.1} parent=11 // pred_fallthru
          _
      $region12: #{fc_block_apply.1} parent=5 // pred_fallthru
        _
      %p168 = scmp.lt.s32.totalorder %s13, 2
      // Predicated region
      $region21: #{fc_block_apply.1} parent=5 // pred_check
        %p169 = pneg %p168
      $region22: #{fc_block_apply.1} parent=5 // pred_check_branch
        %171 = sbr.rel (%p169) target = $region24
      $region23: #{fc_block_apply.1} parent=5 // pred_region
        // Predicated region
        $region25: #{fc_block_apply.1} parent=23 // pred_check
          %p172 = pneg %p45
        $region26: #{fc_block_apply.1} parent=23 // pred_check_branch
          %174 = sbr.rel (%p172) target = $region28
        $region27: #{fc_block_apply.1} parent=23 // pred_region
          %p175 = scmp.lt.s32.totalorder %s20, 1
          %s176 = scalar_select %p175, %s20, 1
          %s177 = smul.addr %s176, 4
          %s178 = scalar_lea.vmem %s0, %s177
        $region28: #{fc_block_apply.1} parent=23 // pred_fallthru
          _
      $region24: #{fc_block_apply.1} parent=5 // pred_fallthru
        _
      %p179 = scmp.le.s32.totalorder 1, %s13
      %p180 = scmp.lt.s32.totalorder %s13, 3
      %p181 = pnand %p179, %p180
      %p182 = pneg %p181
      // Predicated region
      $region29: #{fc_block_apply.1} parent=5 // pred_check
        _
      $region30: #{fc_block_apply.1} parent=5 // pred_check_branch
        %184 = sbr.rel (%p181) target = $region32
      $region31: #{fc_block_apply.1} parent=5 // pred_region
        %s185 = ssub.s32 %s13, 1
        // Predicated region
        $region33: #{fc_block_apply.1} parent=31 // pred_check
          %p186 = pneg %p77
        $region34: #{fc_block_apply.1} parent=31 // pred_check_branch
          %188 = sbr.rel (%p186) target = $region36
        $region35: #{fc_block_apply.1} parent=31 // pred_region
          %189 = dma.done [#allocation3], 1024
        $region36: #{fc_block_apply.1} parent=31 // pred_fallthru
          _
        %p190 = scmp.lt.s32.totalorder %s22, 1
        %s191 = scalar_select %p190, %s22, 1
        %s192 = smul.addr %s191, 4
        %s193 = scalar_lea.vmem %s0, %s192
        %p194 = pneg %p51
        %p195 = pneg %p48
        %p196 = pneg %p77
        %p197 = pneg %p74
        %p198 = scmp.lt.s32.totalorder %s23, 0
        %s199 = scalar_select %p198, %s23, 0
        %s200 = smul.addr %s199, 4
        %s201 = scalar_lea.vmem %s2, %s200
        %p202 = pneg %p103
        %p203 = pneg %p100
        %p204 = pneg %p131
        %p205 = pneg %p128
        %s206 = sand.u32 %s118, 1
        %s207 = scalar_lea.sflag [#allocation4], %s206
        %s208 = sand.u32 %s118, 1
        %s209 = smul.addr %s208, 8
        %s210 = scalar_lea.vmem [#allocation5], %s209
        %p211 = scmp.lt.s32.totalorder %s22, 1
        %s212 = scalar_select %p211, %s22, 1
        %s213 = smul.addr %s212, 4
        %s214 = scalar_lea.vmem %s0, %s213
        %p215 = scmp.lt.s32.totalorder %s23, 0
        %s216 = scalar_select %p215, %s23, 0
        %s217 = smul.addr %s216, 4
        %s218 = scalar_lea.vmem %s2, %s217
        %v220 = vld [vmem:[%s214] sm:$0xf]
        %v221 = vld [vmem:[#allocation2] sm:$0xf]
        %v222 = vld [vmem:[#allocation2 + $0x4] sm:$0xf]
        %v223 = vld [vmem:[#allocation2 + $0x8] sm:$0xf]
        %v224 = vld [vmem:[#allocation2 + $0xc] sm:$0xf]
        %v225 = vld [vmem:[#allocation2 + $0x10] sm:$0xf]
        %v226 = vld [vmem:[#allocation2 + $0x14] sm:$0xf]
        %v227 = vld [vmem:[#allocation2 + $0x18] sm:$0xf]
        %v228 = vld [vmem:[#allocation2 + $0x1c] sm:$0xf]
        %v229 = vld [vmem:[#allocation2 + $0x20] sm:$0xf]
        %v230 = vld [vmem:[#allocation2 + $0x24] sm:$0xf]
        %v231 = vld [vmem:[#allocation2 + $0x28] sm:$0xf]
        %v232 = vld [vmem:[#allocation2 + $0x2c] sm:$0xf]
        %v233 = vld [vmem:[#allocation2 + $0x30] sm:$0xf]
        %v234 = vld [vmem:[#allocation2 + $0x34] sm:$0xf]
        %v235 = vld [vmem:[#allocation2 + $0x38] sm:$0xf]
        %v236 = vld [vmem:[#allocation2 + $0x3c] sm:$0xf]
        %v237 = vld [vmem:[%s218] sm:$0x1]
        %v238 = vlaneseq
        %v239 = vshrl.u32 %v238, 7
        %v240 = vsub.s32 0, %v239
        %v241 = vrot.slane %v237, %v240
        %v258 = vunpack.c.l.b16 %v221
        %v259 = vunpack.c.l.b16 %v222
        %v260 = vunpack.c.l.b16 %v223
        %v261 = vunpack.c.l.b16 %v224
        %v262 = vunpack.c.l.b16 %v225
        %v263 = vunpack.c.l.b16 %v226
        %v264 = vunpack.c.l.b16 %v227
        %v265 = vunpack.c.l.b16 %v228
        %v266 = vunpack.c.l.b16 %v229
        %v267 = vunpack.c.l.b16 %v230
        %v268 = vunpack.c.l.b16 %v231
        %v269 = vunpack.c.l.b16 %v232
        %v270 = vunpack.c.l.b16 %v233
        %v271 = vunpack.c.l.b16 %v234
        %v272 = vunpack.c.l.b16 %v235
        %v273 = vunpack.c.l.b16 %v236
        %v274 = vpack.c.b16 %v259, %v258
        %v275 = vpack.c.b16 %v261, %v260
        %v276 = vpack.c.b16 %v263, %v262
        %v277 = vpack.c.b16 %v265, %v264
        %v278 = vpack.c.b16 %v267, %v266
        %v279 = vpack.c.b16 %v269, %v268
        %v280 = vpack.c.b16 %v271, %v270
        %v281 = vpack.c.b16 %v273, %v272
        %290 = vmatprep.subr.bf16.mxu0 0
        %291 = vmatpush1.bf16.msra.mxu0 %v281
        %292 = vmatprep.subr.bf16.mxu0 0
        %293 = vmatpush1.bf16.msra.mxu0 %v280
        %294 = vmatprep.subr.bf16.mxu0 0
        %295 = vmatpush1.bf16.msra.mxu0 %v279
        %296 = vmatprep.subr.bf16.mxu0 0
        %297 = vmatpush1.bf16.msra.mxu0 %v278
        %298 = vmatprep.subr.bf16.mxu0 0
        %299 = vmatpush1.bf16.msra.mxu0 %v277
        %300 = vmatprep.subr.bf16.mxu0 0
        %301 = vmatpush1.bf16.msra.mxu0 %v276
        %302 = vmatprep.subr.bf16.mxu0 0
        %303 = vmatpush1.bf16.msra.mxu0 %v275
        %304 = vmatprep.subr.bf16.mxu0 0
        %305 = vmatpush1.bf16.msra.mxu0 %v274
        %306 = vmatprep.subr.bf16.mxu0 0
        %307 = vmatpush2.bf16.msra.mxu0 0
        %308 = vmatprep.subr.bf16.mxu0 0
        %309 = vmatpush2.bf16.msra.mxu0 0
        %310 = vmatprep.subr.bf16.mxu0 0
        %311 = vmatpush2.bf16.msra.mxu0 0
        %312 = vmatprep.subr.bf16.mxu0 0
        %313 = vmatpush2.bf16.msra.mxu0 0
        %314 = vmatprep.subr.bf16.mxu0 0
        %315 = vmatpush2.bf16.msra.mxu0 0
        %316 = vmatprep.subr.bf16.mxu0 0
        %317 = vmatpush2.bf16.msra.mxu0 0
        %318 = vmatprep.subr.bf16.mxu0 0
        %319 = vmatpush2.bf16.msra.mxu0 0
        %320 = vmatprep.subr.bf16.mxu0 0
        %321 = vmatpush2.bf16.msra.mxu0 0
        %322 = vmatprep.mubr.bf16.mxu0 0
        %323 = vmatmul.mubr.bf16.gmra.mxu0 %v220
        %v324 = vpop.f32.mrf.mxu0
        %v325 = vadd.f32 %v241, %v324
        %v326 = vpop.f32.mrf.mxu0
        %v327 = vpop.f32.mrf.mxu0
        %v328 = vpop.f32.mrf.mxu0
        %329 = vdwg.mxu0
        %v330 = vmax.f32 %v325, 0.0
        %v331 = vld [vmem:[%s218 + $0x1] sm:$0x1]
        %v332 = vlaneseq
        %v333 = vshrl.u32 %v332, 7
        %v334 = vsub.s32 0, %v333
        %v335 = vrot.slane %v331, %v334
        %v336 = vmul.f32 %v330, %v335
        %v337 = vld [vmem:[%s218 + $0x2] sm:$0x1]
        %v338 = vlaneseq
        %v339 = vshrl.u32 %v338, 7
        %v340 = vsub.s32 0, %v339
        %v341 = vrot.slane %v337, %v340
        %v342 = vadd.f32 %v336, %v341
        %343 = vst [vmem:[%s210] sm:$0xff] %v342
        %s344 = sand.u32 %s118, 1
        %s345 = scalar_lea.sflag [#allocation4], %s344
        %s346 = sand.u32 %s118, 1
        %s347 = smul.addr %s346, 8
        %s348 = scalar_lea.vmem [#allocation5], %s347
        // Predicated region
        $region37: #{fc_block_apply.1} parent=31 // pred_check
          %p349 = pneg %p128
        $region38: #{fc_block_apply.1} parent=31 // pred_check_branch
          %351 = sbr.rel (%p349) target = $region40
        $region39: #{fc_block_apply.1} parent=31 // pred_region
          %s353 = ssub.s32 128, 128
          %354 = vsyncadd %s345, %s353
          %s355 = sadd.s32 %s23, %s22
          %s356 = smul.addr %s355, 128
          %s357 = scalar_lea.hbm %s3, %s356
          %s359 = sshll.u32 %s348, 4
          %s360 = int_to_ptr.vmem [resolvable:$true] %s359
          %362 = dma.vmem_to_hbm [thread:$0]  %s360, 128, %s357, %s345
        $region40: #{fc_block_apply.1} parent=31 // pred_fallthru
          _
      $region32: #{fc_block_apply.1} parent=5 // pred_fallthru
        _
      %p363 = scmp.le.s32.totalorder 2, %s13
      // Predicated region
      $region41: #{fc_block_apply.1} parent=5 // pred_check
        %p364 = pneg %p363
      $region42: #{fc_block_apply.1} parent=5 // pred_check_branch
        %366 = sbr.rel (%p364) target = $region44
      $region43: #{fc_block_apply.1} parent=5 // pred_region
        %s367 = ssub.s32 %s13, 2
        // Predicated region
        $region45: #{fc_block_apply.1} parent=43 // pred_check
          %p368 = pneg %p134
        $region46: #{fc_block_apply.1} parent=43 // pred_check_branch
          %370 = sbr.rel (%p368) target = $region48
        $region47: #{fc_block_apply.1} parent=43 // pred_region
          %s371 = sand.u32 %s119, 1
          %s372 = scalar_lea.sflag [#allocation4], %s371
          %s373 = sand.u32 %s119, 1
          %s374 = smul.addr %s373, 8
          %s375 = scalar_lea.vmem [#allocation5], %s374
          %376 = dma.done %s372, 128
        $region48: #{fc_block_apply.1} parent=43 // pred_fallthru
          _
      $region44: #{fc_block_apply.1} parent=5 // pred_fallthru
        _
    $region6: #{fc_block_apply.1} parent=1 // loop_footer
      %s17 = sadd.s32 1, %s13
    $region7: #{fc_block_apply.1} parent=1 // loop_footer_branch
      %12 = sbr.rel target = $region3
    $region8: #{fc_block_apply.1} parent=1 // loop_exit
      _
    %377 = vsyncpa [#allocation3], 1
    %s378 = scalar_lea.sflag [#allocation3], 1
    %379 = vsyncpa %s378, 1
    %380 = vsyncpa [#allocation4], 1
    %s381 = scalar_lea.sflag [#allocation4], 1
    %382 = vsyncpa %s381, 1

</llo_original>
